<compile_context>
chip_gen: v7x
topology: tpu7x:2x2x1
jax: 0.10.0
libtpu: 0.0.40
codegen_flags: <defaults>
</compile_context>

<pallas_src>
import jax
import jax.numpy as jnp
from jax.experimental import pallas as pl
from jax.experimental.pallas import tpu as pltpu


def _log_sigmoid(x):
    # Numerically stable log(sigmoid(x)) = min(x, 0) - log1p(exp(-|x|))
    return jnp.minimum(x, 0.0) - jnp.log1p(jnp.exp(-jnp.abs(x)))


def _skipgram_tile_kernel(a_ref, b_ref, sign_ref, out_ref):
    # a_ref, b_ref : (D, TILE_N) f32 — batch is lane-dense (lane axis = 128 wide).
    # sign_ref     : (1, TILE_N) f32 — +1 for positive pairs, -1 for negatives,
    #                0 for padding rows (masks them out of the loss).
    # out_ref      : (1, 8, 128) f32 — per-tile partial loss, broadcast over block.
    prod = a_ref[...] * b_ref[...]                      # VPU elementwise, lane-dense
    score = jnp.sum(prod, axis=0, keepdims=True)        # (1, TILE_N) sublane reduce (XLU)
    sign = sign_ref[...]
    z = sign * score                                    # +score (pos) / -score (neg)
    contrib = jnp.abs(sign) * _log_sigmoid(z)           # padding rows contribute 0
    partial = jnp.sum(contrib)                          # scalar partial (negated in glue)
    out_ref[...] = jnp.broadcast_to(jnp.reshape(partial, (1, 1, 1)), out_ref.shape)


def skipgram_loss(u_weight, v_weight, pos_u, pos_v, neg_u, neg_v, *, tile_n=512):
    assert tile_n % 128 == 0, "tile_n must be a multiple of 128 (lane width)"
    emb_dim = u_weight.shape[1]

    # Embedding gathers (glue). Mirrors the PyTorch forward:
    #   embed_pos_u = v_embedding_matrix(pos_u); embed_pos_v = u_embedding_matrix(pos_v)
    #   embed_neg_u = u_embedding_matrix(neg_u); embed_neg_v = v_embedding_matrix(neg_v)
    # TODO(synk): fuse these gathers into the kernel (tables in pl.ANY + scalar-prefetched
    # indices + manual async copies) to cut the extra HBM round-trip of the gathered rows.
    embed_pos_u = jnp.take(v_weight, pos_u, axis=0)
    embed_pos_v = jnp.take(u_weight, pos_v, axis=0)
    embed_neg_u = jnp.take(u_weight, neg_u, axis=0)
    embed_neg_v = jnp.take(v_weight, neg_v, axis=0)

    # One fused stream: rows = [positives; negatives], with a per-row sign.
    a = jnp.concatenate([embed_pos_u, embed_neg_u], axis=0).astype(jnp.float32)
    b = jnp.concatenate([embed_pos_v, embed_neg_v], axis=0).astype(jnp.float32)
    sign = jnp.concatenate(
        [jnp.ones((pos_u.shape[0],), jnp.float32),
         -jnp.ones((neg_u.shape[0],), jnp.float32)])

    n = a.shape[0]
    num_tiles = pl.cdiv(n, tile_n)
    n_pad = num_tiles * tile_n
    pad = n_pad - n
    if pad:
        a = jnp.pad(a, ((0, pad), (0, 0)))
        b = jnp.pad(b, ((0, pad), (0, 0)))
        sign = jnp.pad(sign, (0, pad))   # padded rows get sign 0 -> masked out

    # Lane-dense layout: batch on the lane axis, embedding dim on sublanes.
    a_t = a.T                       # (D, n_pad)
    b_t = b.T                       # (D, n_pad)
    sign_2d = sign.reshape(1, n_pad)

    partials = pl.pallas_call(
        _skipgram_tile_kernel,
        out_shape=jax.ShapeDtypeStruct((num_tiles, 8, 128), jnp.float32),
        grid_spec=pltpu.PrefetchScalarGridSpec(
            num_scalar_prefetch=0,
            grid=(num_tiles,),
            in_specs=[
                pl.BlockSpec((emb_dim, tile_n), lambda i: (0, i)),
                pl.BlockSpec((emb_dim, tile_n), lambda i: (0, i)),
                pl.BlockSpec((1, tile_n), lambda i: (0, i)),
            ],
            out_specs=pl.BlockSpec((1, 8, 128), lambda i: (i, 0, 0)),
        ),
        compiler_params=pltpu.CompilerParams(
            # Per-tile independent outputs -> batch axis is truly parallel
            # (lets both v7x TensorCores run; harmless on v5e/v6e).
            dimension_semantics=("parallel",),
            # Safe on all gens (v7x default scoped VMEM is 32 MiB).
            vmem_limit_bytes=32 * 1024 * 1024,
        ),
    )(a_t, b_t, sign_2d)

    # Tiny final reduction + negate in JAX.
    return -jnp.sum(partials[:, 0, 0])


def skipgram_loss_ref(u_weight, v_weight, pos_u, pos_v, neg_u, neg_v):
    # Pure-JAX reference for correctness check (mirrors the PyTorch module).
    embed_pos_u = v_weight[pos_u]
    embed_pos_v = u_weight[pos_v]
    score = jnp.sum(embed_pos_u * embed_pos_v, axis=1)
    log_target = _log_sigmoid(score)
    embed_neg_u = u_weight[neg_u]
    embed_neg_v = v_weight[neg_v]
    neg_score = jnp.sum(embed_neg_u * embed_neg_v, axis=1)
    sum_log_sampled = _log_sigmoid(-neg_score)
    return -(jnp.sum(log_target) + jnp.sum(sum_log_sampled))


if __name__ == "__main__":
    embedding_dim = 32
    vocab_size = 64

    key = jax.random.PRNGKey(0)
    k_u, k_v, k_pu, k_pv, k_nu, k_nv = jax.random.split(key, 6)

    # --- Case 1: module-faithful init (u ~ U(-0.5/D, 0.5/D), v = 0), tiny batch ---
    initrange = 0.5 / embedding_dim
    u_weight = jax.random.uniform(
        k_u, (vocab_size, embedding_dim), jnp.float32,
        minval=-initrange, maxval=initrange)
    v_weight0 = jnp.zeros((vocab_size, embedding_dim), jnp.float32)

    n_pos, n_neg = 8, 8
    pos_u = jax.random.randint(k_pu, (n_pos,), 0, vocab_size, jnp.int32)
    pos_v = jax.random.randint(k_pv, (n_pos,), 0, vocab_size, jnp.int32)
    neg_u = jax.random.randint(k_nu, (n_neg,), 0, vocab_size, jnp.int32)
    neg_v = jax.random.randint(k_nv, (n_neg,), 0, vocab_size, jnp.int32)

    loss = skipgram_loss(u_weight, v_weight0, pos_u, pos_v, neg_u, neg_v)
    jax.block_until_ready(loss)
    loss_ref = skipgram_loss_ref(u_weight, v_weight0, pos_u, pos_v, neg_u, neg_v)
    assert jnp.allclose(loss, loss_ref, rtol=1e-5, atol=1e-5), (loss, loss_ref)

    # --- Case 2: non-degenerate v weights, multi-tile grid + padded tail rows ---
    v_weight = jax.random.uniform(
        k_v, (vocab_size, embedding_dim), jnp.float32, minval=-1.0, maxval=1.0)
    n_pos2, n_neg2 = 100, 150     # n = 250 -> two 128-row tiles, 6 padded rows
    k2 = jax.random.split(key, 4)
    pos_u2 = jax.random.randint(k2[0], (n_pos2,), 0, vocab_size, jnp.int32)
    pos_v2 = jax.random.randint(k2[1], (n_pos2,), 0, vocab_size, jnp.int32)
    neg_u2 = jax.random.randint(k2[2], (n_neg2,), 0, vocab_size, jnp.int32)
    neg_v2 = jax.random.randint(k2[3], (n_neg2,), 0, vocab_size, jnp.int32)

    loss2 = skipgram_loss(u_weight, v_weight, pos_u2, pos_v2, neg_u2, neg_v2, tile_n=128)
    jax.block_until_ready(loss2)
    loss2_ref = skipgram_loss_ref(u_weight, v_weight, pos_u2, pos_v2, neg_u2, neg_v2)
    assert jnp.allclose(loss2, loss2_ref, rtol=1e-5, atol=1e-5), (loss2, loss2_ref)

    print("KERNEL_OK")
</pallas_src>

<mosaic_0001>
module attributes {stable_mosaic.version = 11 : i64} {
  func.func @_skipgram_tile_kernel(%arg0: i32, %arg1: memref<32x512xf32, #tpu.memory_space<vmem>>, %arg2: memref<32x512xf32, #tpu.memory_space<vmem>>, %arg3: memref<1x512xf32, #tpu.memory_space<vmem>>, %arg4: memref<1x8x128xf32, #tpu.memory_space<vmem>>) attributes {dimension_semantics = [#tpu.dimension_semantics<parallel>], iteration_bounds = array<i64: 1>, scalar_prefetch = 0 : i64, scratch_operands = 0 : i64, tpu.core_type = #tpu.core_type<tc>, window_params = [{transform_indices = @transform_0, window_bounds = array<i64: 32, 512>}, {transform_indices = @transform_1, window_bounds = array<i64: 32, 512>}, {transform_indices = @transform_2, window_bounds = array<i64: 1, 512>}, {transform_indices = @transform_3, window_bounds = array<i64: 1, 8, 128>}]} {
    %c0 = arith.constant 0 : index
    %c0_0 = arith.constant 0 : index
    %0 = vector.load %arg1[%c0, %c0_0] : memref<32x512xf32, #tpu.memory_space<vmem>>, vector<32x512xf32>
    %c0_1 = arith.constant 0 : index
    %c0_2 = arith.constant 0 : index
    %1 = vector.load %arg2[%c0_1, %c0_2] : memref<32x512xf32, #tpu.memory_space<vmem>>, vector<32x512xf32>
    %2 = arith.mulf %0, %1 : vector<32x512xf32>
    %cst = arith.constant dense<0.000000e+00> : vector<512xf32>
    %3 = vector.multi_reduction <add>, %2, %cst [0] : vector<32x512xf32> to vector<512xf32>
    %4 = vector.shape_cast %3 : vector<512xf32> to vector<1x512xf32>
    %c0_3 = arith.constant 0 : index
    %c0_4 = arith.constant 0 : index
    %5 = vector.load %arg3[%c0_3, %c0_4] : memref<1x512xf32, #tpu.memory_space<vmem>>, vector<1x512xf32>
    %6 = arith.mulf %5, %4 : vector<1x512xf32>
    %7 = math.absf %5 : vector<1x512xf32>
    %cst_5 = arith.constant 0.000000e+00 : f32
    %8 = vector.broadcast %cst_5 : f32 to vector<1x512xf32>
    %9 = arith.minimumf %6, %8 : vector<1x512xf32>
    %10 = math.absf %6 : vector<1x512xf32>
    %cst_6 = arith.constant 0.000000e+00 : f32
    %11 = vector.broadcast %cst_6 : f32 to vector<1x512xf32>
    %12 = arith.subf %11, %10 : vector<1x512xf32>
    %13 = math.exp %12 : vector<1x512xf32>
    %14 = math.log1p %13 : vector<1x512xf32>
    %15 = arith.subf %9, %14 : vector<1x512xf32>
    %16 = arith.mulf %7, %15 : vector<1x512xf32>
    %17 = vector.shape_cast %16 : vector<1x512xf32> to vector<1x1x512xf32>
    %cst_7 = arith.constant dense<0.000000e+00> : vector<1xf32>
    %18 = vector.multi_reduction <add>, %17, %cst_7 [1, 2] : vector<1x1x512xf32> to vector<1xf32>
    %19 = vector.shape_cast %18 : vector<1xf32> to vector<1x1x1xf32>
    %20 = vector.extract %19[0, 0, 0] : f32 from vector<1x1x1xf32>
    %21 = vector.broadcast %20 : f32 to vector<1x1x1xf32>
    %22 = vector.shape_cast %21 : vector<1x1x1xf32> to vector<1x1x1xf32>
    %23 = vector.broadcast %22 : vector<1x1x1xf32> to vector<1x8x128xf32>
    %c0_8 = arith.constant 0 : index
    %c0_9 = arith.constant 0 : index
    %c0_10 = arith.constant 0 : index
    %24 = vector.load %arg4[%c0_8, %c0_9, %c0_10] : memref<1x8x128xf32, #tpu.memory_space<vmem>>, vector<1x8x128xf32>
    tpu.vector_store %arg4[%c0_8, %c0_9, %c0_10], %23 {strides = array<i32>} : memref<1x8x128xf32, #tpu.memory_space<vmem>>, vector<1x8x128xf32>,
    return
  }
  func.func @transform_0(%arg0: i32) -> (i32, i32) {
    %c0_i32 = arith.constant 0 : i32
    %c0_i32_0 = arith.constant 0 : i32
    return %c0_i32, %arg0 : i32, i32
  }
  func.func @transform_1(%arg0: i32) -> (i32, i32) {
    %c0_i32 = arith.constant 0 : i32
    %c0_i32_0 = arith.constant 0 : i32
    return %c0_i32, %arg0 : i32, i32
  }
  func.func @transform_2(%arg0: i32) -> (i32, i32) {
    %c0_i32 = arith.constant 0 : i32
    %c0_i32_0 = arith.constant 0 : i32
    return %c0_i32, %arg0 : i32, i32
  }
  func.func @transform_3(%arg0: i32) -> (i32, i32, i32) {
    %c0_i32 = arith.constant 0 : i32
    %c0_i32_0 = arith.constant 0 : i32
    %c0_i32_1 = arith.constant 0 : i32
    return %arg0, %c0_i32, %c0_i32_0 : i32, i32, i32
  }
}

</mosaic_0001>

<llo_original>
// kernel: tpu_custom_call.1
$region0: #{tpu_custom_call.1}
  #allocation0 [shape = 'u32[]', space=smem, size = 0x4, offset = 0x4, fixed_abs, tag = 'smem constant byte address 0x4 - core index']
  #allocation1 [shape = 'u32[144,128]{1,0:T(1,128)}', space=vmem, size = 0x12000, scoped, tag = 'internal scratch']
  %s0 = inlined_call_operand.hbm [shape: f32[32,512], index: 0, kind: input, shape index: {}]
  %s1 = inlined_call_operand.hbm [shape: f32[32,512], index: 1, kind: input, shape index: {}]
  %s2 = inlined_call_operand.vmem [shape: f32[1,512], index: 2, kind: input, shape index: {}]
  %s3 = inlined_call_operand.hbm [shape: f32[1,8,128], index: 3, kind: output, shape index: {}]
  %s4 = sld [smem:[#allocation0]]
  $region30: #{tpu_custom_call.1} parent=0
    _
  %s6 = ssub.s32 1, %s4
  %s7 = scalar_select 0, %s6, %s4
  $region1: #{tpu_custom_call.1} parent=0
    #allocation2 [shape = 'u8[65536]{0}', space=vmem, size = 0x10000, scoped, tag = 'input window, operand 0, single buffered']
    #allocation3 [shape = 's32[1]{0}', space=sflag, size = 0x4, scoped, tag = 'scoped memory for tpu_custom_call.1']
    #allocation4 [shape = 's32[1]{0}', space=sflag, size = 0x4, scoped, tag = 'scoped memory for tpu_custom_call.1']
    #allocation5 [shape = 'u8[65536]{0}', space=vmem, size = 0x10000, scoped, tag = 'input window, operand 1, single buffered']
    #allocation6 [shape = 's32[1]{0}', space=sflag, size = 0x4, scoped, tag = 'scoped memory for tpu_custom_call.1']
    #allocation7 [shape = 'u8[4096]{0}', space=vmem, size = 0x1000, scoped, tag = 'output window, operand 0, single buffered']
    %8 = vsyncpa [#allocation3], 0
    %9 = vsyncpa [#allocation6], 0
    %10 = vsyncpa [#allocation4], 0
    // Predicated region
    $region2: #{tpu_custom_call.1} parent=1 // pred_check
      _
    $region3: #{tpu_custom_call.1} parent=1 // pred_check_branch
      %12 = sbr.rel (0) target = $region5
    $region4: #{tpu_custom_call.1} parent=1 // pred_region
      %s14 = ssub.s32 2048, 2048
      %15 = vsyncadd [#allocation3], %s14
      %s16 = sshll.u32 [#allocation2], 4
      %s17 = int_to_ptr.vmem [resolvable:$true] %s16
      %22 = dma.hbm_to_vmem [thread:$0]  %s0, 2048, %s17, [#allocation3], 512, 512, 32
    $region5: #{tpu_custom_call.1} parent=1 // pred_fallthru
      _
    // Predicated region
    $region6: #{tpu_custom_call.1} parent=1 // pred_check
      _
    $region7: #{tpu_custom_call.1} parent=1 // pred_check_branch
      %24 = sbr.rel (0) target = $region9
    $region8: #{tpu_custom_call.1} parent=1 // pred_region
      %s26 = ssub.s32 2048, 2048
      %27 = vsyncadd [#allocation6], %s26
      %s28 = sshll.u32 [#allocation5], 4
      %s29 = int_to_ptr.vmem [resolvable:$true] %s28
      %34 = dma.hbm_to_vmem [thread:$0]  %s1, 2048, %s29, [#allocation6], 512, 512, 32
    $region9: #{tpu_custom_call.1} parent=1 // pred_fallthru
      _
    // Predicated region
    $region10: #{tpu_custom_call.1} parent=1 // pred_check
      _
    $region11: #{tpu_custom_call.1} parent=1 // pred_check_branch
      %36 = sbr.rel (0) target = $region13
    $region12: #{tpu_custom_call.1} parent=1 // pred_region
      _
    $region13: #{tpu_custom_call.1} parent=1 // pred_fallthru
      _
    // Predicated region
    $region14: #{tpu_custom_call.1} parent=1 // pred_check
      _
    $region15: #{tpu_custom_call.1} parent=1 // pred_check_branch
      %38 = sbr.rel (0) target = $region17
    $region16: #{tpu_custom_call.1} parent=1 // pred_region
      %39 = dma.done [#allocation3], 2048
    $region17: #{tpu_custom_call.1} parent=1 // pred_fallthru
      _
    // Predicated region
    $region18: #{tpu_custom_call.1} parent=1 // pred_check
      _
    $region19: #{tpu_custom_call.1} parent=1 // pred_check_branch
      %41 = sbr.rel (0) target = $region21
    $region20: #{tpu_custom_call.1} parent=1 // pred_region
      %42 = dma.done [#allocation6], 2048
    $region21: #{tpu_custom_call.1} parent=1 // pred_fallthru
      _
    %v43 = vld [vmem:[#allocation2] sm:$0xff]
    %v44 = vld [vmem:[#allocation2 + $0x8] sm:$0xff]
    %v45 = vld [vmem:[#allocation2 + $0x10] sm:$0xff]
    %v46 = vld [vmem:[#allocation2 + $0x18] sm:$0xff]
    %v47 = vld [vmem:[#allocation2 + $0x20] sm:$0xff]
    %v48 = vld [vmem:[#allocation2 + $0x28] sm:$0xff]
    %v49 = vld [vmem:[#allocation2 + $0x30] sm:$0xff]
    %v50 = vld [vmem:[#allocation2 + $0x38] sm:$0xff]
    %v51 = vld [vmem:[#allocation2 + $0x40] sm:$0xff]
    %v52 = vld [vmem:[#allocation2 + $0x48] sm:$0xff]
    %v53 = vld [vmem:[#allocation2 + $0x50] sm:$0xff]
    %v54 = vld [vmem:[#allocation2 + $0x58] sm:$0xff]
    %v55 = vld [vmem:[#allocation2 + $0x60] sm:$0xff]
    %v56 = vld [vmem:[#allocation2 + $0x68] sm:$0xff]
    %v57 = vld [vmem:[#allocation2 + $0x70] sm:$0xff]
    %v58 = vld [vmem:[#allocation2 + $0x78] sm:$0xff]
    %v59 = vld [vmem:[#allocation5] sm:$0xff]
    %v60 = vld [vmem:[#allocation5 + $0x8] sm:$0xff]
    %v61 = vld [vmem:[#allocation5 + $0x10] sm:$0xff]
    %v62 = vld [vmem:[#allocation5 + $0x18] sm:$0xff]
    %v63 = vld [vmem:[#allocation5 + $0x20] sm:$0xff]
    %v64 = vld [vmem:[#allocation5 + $0x28] sm:$0xff]
    %v65 = vld [vmem:[#allocation5 + $0x30] sm:$0xff]
    %v66 = vld [vmem:[#allocation5 + $0x38] sm:$0xff]
    %v67 = vld [vmem:[#allocation5 + $0x40] sm:$0xff]
    %v68 = vld [vmem:[#allocation5 + $0x48] sm:$0xff]
    %v69 = vld [vmem:[#allocation5 + $0x50] sm:$0xff]
    %v70 = vld [vmem:[#allocation5 + $0x58] sm:$0xff]
    %v71 = vld [vmem:[#allocation5 + $0x60] sm:$0xff]
    %v72 = vld [vmem:[#allocation5 + $0x68] sm:$0xff]
    %v73 = vld [vmem:[#allocation5 + $0x70] sm:$0xff]
    %v74 = vld [vmem:[#allocation5 + $0x78] sm:$0xff]
    %v75 = vmul.f32 %v43, %v59
    %v76 = vmul.f32 %v44, %v60
    %v77 = vmul.f32 %v45, %v61
    %v78 = vmul.f32 %v46, %v62
    %v79 = vmul.f32 %v47, %v63
    %v80 = vmul.f32 %v48, %v64
    %v81 = vmul.f32 %v49, %v65
    %v82 = vmul.f32 %v50, %v66
    %v83 = vmul.f32 %v51, %v67
    %v84 = vmul.f32 %v52, %v68
    %v85 = vmul.f32 %v53, %v69
    %v86 = vmul.f32 %v54, %v70
    %v87 = vmul.f32 %v55, %v71
    %v88 = vmul.f32 %v56, %v72
    %v89 = vmul.f32 %v57, %v73
    %v90 = vmul.f32 %v58, %v74
    %v91 = vadd.f32 %v75, %v79
    %v92 = vadd.f32 %v91, %v83
    %v93 = vadd.f32 %v92, %v87
    %v94 = vrot.slane %v93, 4
    %v95 = vadd.f32 %v93, %v94
    %v96 = vrot.slane %v95, 2
    %v97 = vadd.f32 %v95, %v96
    %v98 = vrot.slane %v97, 1
    %v99 = vadd.f32 %v97, %v98
    %v100 = vadd.f32 %v76, %v80
    %v101 = vadd.f32 %v100, %v84
    %v102 = vadd.f32 %v101, %v88
    %v103 = vrot.slane %v102, 4
    %v104 = vadd.f32 %v102, %v103
    %v105 = vrot.slane %v104, 2
    %v106 = vadd.f32 %v104, %v105
    %v107 = vrot.slane %v106, 1
    %v108 = vadd.f32 %v106, %v107
    %v109 = vadd.f32 %v77, %v81
    %v110 = vadd.f32 %v109, %v85
    %v111 = vadd.f32 %v110, %v89
    %v112 = vrot.slane %v111, 4
    %v113 = vadd.f32 %v111, %v112
    %v114 = vrot.slane %v113, 2
    %v115 = vadd.f32 %v113, %v114
    %v116 = vrot.slane %v115, 1
    %v117 = vadd.f32 %v115, %v116
    %v118 = vadd.f32 %v78, %v82
    %v119 = vadd.f32 %v118, %v86
    %v120 = vadd.f32 %v119, %v90
    %v121 = vrot.slane %v120, 4
    %v122 = vadd.f32 %v120, %v121
    %v123 = vrot.slane %v122, 2
    %v124 = vadd.f32 %v122, %v123
    %v125 = vrot.slane %v124, 1
    %v126 = vadd.f32 %v124, %v125
    %v127 = vld [vmem:[%s2] sm:$0xf]
    %v132 = vcombine.low %v99, %v108
    %v133 = vcombine.low %v117, %v126
    %v135 = vunpack.c.l.s4 1966171168
    %v136 = vunpack.c.0.s8 %v135
    %v137 = vlaneseq
    %v138 = vshrl.u32 %v137, 7
    %v139 = vsub.s32 %v136, %v138
    %v140 = vrot.slane %v132, %v139
    %v142 = vunpack.c.l.s4 1966171168
    %v143 = vunpack.c.0.s8 %v142
    %v144 = vlaneseq
    %v145 = vshrl.u32 %v144, 7
    %v146 = vsub.s32 %v143, %v145
    %v147 = vrot.slane %v133, %v146
    %v148 = vcombine.low %v140, %v147
    %v150 = vunpack.c.l.s4 1966171168
    %v151 = vunpack.c.0.s8 %v150
    %v152 = vlaneseq
    %v153 = vshrl.u32 %v152, 7
    %v154 = vsub.s32 %v151, %v153
    %v155 = vrot.slane %v148, %v154
    %v157 = vmul.f32 %v127, %v155
    %v158 = vand.u32 2147483647, %v127
    %v159 = vmin.f32 %v157, 0.0
    %v160 = vand.u32 2147483647, %v157
    %v161 = vsub.f32 0.0, %v160
    %v162 = vmul.f32 %v161, 1.442695
    %v163 = vpow.pop %v162
    %v164 = vadd.f32 %v163, 1.0
    %v165 = vlog2.pop %v164
    %v166 = vmul.f32 %v165, 0.6931472
    %v167 = vmul.f32 -0.5, %v163
    %v168 = vadd.f32 %v167, 1.0
    %v169 = vmul.f32 %v168, %v163
    %v170 = vand.u32 2147483647, %v163
    %vm171 = vcmp.lt.f32.partialorder %v170, 0.0004427343
    %v172 = vsel %vm171, %v169, %v166
    %v173 = vsub.f32 %v159, %v172
    %v174 = vmul.f32 %v158, %v173
    %v176 = vlaneseq
    %v177 = vshrl.u32 %v176, 7
    %v178 = vsub.s32 0, %v177
    %v179 = vrot.slane %v174, %v178
    %v180 = vlaneseq
    %v181 = vshrl.u32 %v180, 7
    %v182 = vsub.s32 1, %v181
    %v183 = vrot.slane %v174, %v182
    %v184 = vlaneseq
    %v185 = vshrl.u32 %v184, 7
    %v186 = vsub.s32 2, %v185
    %v187 = vrot.slane %v174, %v186
    %v188 = vlaneseq
    %v189 = vshrl.u32 %v188, 7
    %v190 = vsub.s32 3, %v189
    %v191 = vrot.slane %v174, %v190
    %vm196 = vcmask 1040384
    %v197 = vsel %vm196, %v179, 0.0
    %v198 = vsel %vm196, %v183, 0.0
    %v199 = vadd.f32 %v197, %v198
    %v200 = vsel %vm196, %v187, 0.0
    %v201 = vadd.f32 %v199, %v200
    %v202 = vsel %vm196, %v191, 0.0
    %v203 = vadd.f32 %v201, %v202
    %204 = vadd.xlane.f32.xlu0 %v203
    %v205 = vpop.xlane.xlu0 %204
    %v206 = vrot.slane %v205, 4
    %v207 = vadd.f32 %v205, %v206
    %v208 = vrot.slane %v207, 2
    %v209 = vadd.f32 %v207, %v208
    %v210 = vrot.slane %v209, 1
    %v211 = vadd.f32 %v209, %v210
    %s212 = vtos %v211
    %v213 = vstv %s212
    %214 = vst [vmem:[#allocation7] sm:$0xff] %v213
    // Predicated region
    $region22: #{tpu_custom_call.1} parent=1 // pred_check
      _
    $region23: #{tpu_custom_call.1} parent=1 // pred_check_branch
      %216 = sbr.rel (0) target = $region25
    $region24: #{tpu_custom_call.1} parent=1 // pred_region
      %s218 = ssub.s32 128, 128
      %219 = vsyncadd [#allocation4], %s218
      %s221 = sshll.u32 [#allocation7], 4
      %s222 = int_to_ptr.vmem [resolvable:$true] %s221
      %224 = dma.vmem_to_hbm [thread:$0]  %s222, 128, %s3, [#allocation4]
    $region25: #{tpu_custom_call.1} parent=1 // pred_fallthru
      _
    // Predicated region
    $region26: #{tpu_custom_call.1} parent=1 // pred_check
      _
    $region27: #{tpu_custom_call.1} parent=1 // pred_check_branch
      %226 = sbr.rel (0) target = $region29
    $region28: #{tpu_custom_call.1} parent=1 // pred_region
      %227 = dma.done [#allocation4], 128
    $region29: #{tpu_custom_call.1} parent=1 // pred_fallthru
      _
    %228 = vsyncpa [#allocation3], 1
    %229 = vsyncpa [#allocation6], 1
    %230 = vsyncpa [#allocation4], 1

</llo_original>
